<compile_context>
chip_gen: v6e
topology: v6e:2x2x1
jax: 0.10.0
libtpu: 0.0.40
codegen_flags: <defaults>
</compile_context>

<pallas_src>
import functools
import math

import jax
import jax.numpy as jnp
from jax.experimental import pallas as pl
from jax.experimental.pallas import tpu as pltpu


# ---------------------------------------------------------------------------
# Hardware-aware budgets
# ---------------------------------------------------------------------------
@functools.lru_cache(maxsize=None)
def _vmem_capacity_bytes():
    try:
        return int(pltpu.get_tpu_info().vmem_capacity_bytes)
    except Exception:
        return 64 * 1024 * 1024  # conservative (v7x-sized) fallback


def _vmem_budget_bytes():
    cap = _vmem_capacity_bytes()
    return max(32 * 1024 * 1024, (cap * 3) // 4)  # ~96 MiB v5e/v6e, ~48 MiB v7x


def _max_x_block_bytes():
    cap = _vmem_capacity_bytes()
    return 16 * 1024 * 1024 if cap >= 100 * 1024 * 1024 else 8 * 1024 * 1024


# ---------------------------------------------------------------------------
# Kernels
# ---------------------------------------------------------------------------
def _conv2x2_kernel(x_ref, w_ref, b_ref, o_ref):
    """Fused im2col + matmul for a 2x2 / stride-2 conv; NCHW output block.

    x_ref: (1, th, 2, Wo, 2C)  -- th output rows; dim 2 = input-row parity,
                                  horizontal pixel pair folded into the lane dim.
    w_ref: (2, 2C, tco)        -- pre-folded weights (compute dtype).
    b_ref: (1, tco)            -- bias (f32).
    o_ref: (1, tco, th*Wo)     -- NCHW output block (lane dim = flattened spatial).
    """
    _, th, _, wo, k2c = x_ref.shape
    xb = x_ref[...]
    # NOTE: these reshapes are free when Wo % 8 == 0 (typical UNet resolutions);
    # otherwise Mosaic inserts a small per-step retiling copy.
    x_even = xb[0, :, 0, :, :].reshape(th * wo, k2c)   # input rows 2*ho
    x_odd = xb[0, :, 1, :, :].reshape(th * wo, k2c)    # input rows 2*ho + 1
    acc = jnp.dot(x_even, w_ref[0], preferred_element_type=jnp.float32)
    acc = acc + jnp.dot(x_odd, w_ref[1], preferred_element_type=jnp.float32)
    acc = acc + b_ref[...].astype(jnp.float32)
    # (th*Wo, tco) -> (tco, th*Wo) on the XLU (no HBM traffic, overlaps the DMA
    # pipeline) so the block stores straight into the NCHW-shaped output.
    o_ref[...] = jnp.transpose(acc).reshape(o_ref.shape).astype(o_ref.dtype)


def _avgpool2x2_kernel(x_ref, p_ref, o_ref):
    """2x2 / stride-2 average pool, NCHW in / NCHW out.

    x_ref: (1, tc, th, 4*Wo)  -- each lane row holds the two source rows of one
                                 output row, concatenated (free wrapper reshape).
    p_ref: (4*Wo, Wo)          -- constant pooling matrix (0.25 at window members).
    o_ref: (1, tc, th, Wo)
    """
    _, tc, th, lane = x_ref.shape
    wo = o_ref.shape[-1]
    xm = x_ref[...].reshape(tc * th, lane)     # free when th % 8 == 0
    y = jnp.dot(xm, p_ref[...], preferred_element_type=jnp.float32)
    o_ref[...] = y.reshape(1, tc, th, wo).astype(o_ref.dtype)


# ---------------------------------------------------------------------------
# Tiling helpers
# ---------------------------------------------------------------------------
def _pick_conv_tiles(n, c, cout, ho, wo, x_isz, out_isz):
    budget = _vmem_budget_bytes()
    max_xblk = _max_x_block_bytes()

    # ---- Cout tile: keep the whole folded weight slab resident if possible ----
    def w_block_bytes(t):
        return 2 * (2 * c) * t * x_isz

    if 2 * w_block_bytes(cout) <= budget // 3:          # double-buffered by Pallas
        tco = cout
    else:
        tco = max(128, ((budget // 3) // (2 * w_block_bytes(1))) // 128 * 128)
        tco = min(tco, cout)

    # ---- H tile: as many output rows as fit; tm = th*wo must be lane-aligned ----
    unit = 128 // math.gcd(wo, 128)        # th % unit == 0  =>  (th*wo) % 128 == 0
    x_row = 2 * wo * (2 * c) * x_isz       # input bytes per output row
    per_row = (2 * x_row                    # double-buffered input block
               + 2 * wo * tco * out_isz     # double-buffered output block
               + 2 * wo * tco * 4)          # f32 accumulator + its transposed copy
    avail = budget - 2 * w_block_bytes(tco) - (2 << 20)
    th = min(ho, max(1, avail // per_row), max(1, max_xblk // x_row))
    if th < ho:
        th = max(unit, (th // unit) * unit)
        if th >= ho:
            th = ho
    # Megacore balance: make at least 2 parallel grid steps when batch == 1.
    if n == 1 and th >= ho and ho > unit:
        half = -(-ho // 2)
        th2 = -(-half // unit) * unit
        if th2 < ho:
            th = th2
    return th, tco


def _pick_pool_tiles(c, ho, lane, isz):
    xblk = min(_max_x_block_bytes(), _vmem_budget_bytes() // 6)
    if ho <= 8 or ho % 8 != 0:
        th = ho                      # full H (reshape may retile for tiny/odd Ho)
    else:
        th = min(ho, 64)             # multiple of 8 -> free in-kernel reshapes
    row_bytes = lane * isz
    tc = max(1, min(c, xblk // max(1, th * row_bytes)))
    return th, tc


# ---------------------------------------------------------------------------
# Forward wrappers
# ---------------------------------------------------------------------------
@jax.jit
def conv_downsample_2x2(x, w_stacked, bias2d):
    """x: (N, C, H, W). w_stacked: (2, 2C, Cout) in compute dtype. bias2d: (1, Cout) f32."""
    n, c, h, w = x.shape
    ho, wo = h // 2, w // 2
    cout = w_stacked.shape[-1]
    out_dtype = x.dtype
    cdt = w_stacked.dtype

    if h != 2 * ho or w != 2 * wo:
        x = x[:, :, : 2 * ho, : 2 * wo]
    # NCHW -> NHWC (+ cast to the compute dtype) -- one fused XLA copy -- then a
    # *free* reshape folding the 2x2 stencil: (N, Ho, 2, Wo, 2C).
    # TODO(synk): this is the one remaining boundary copy on the conv path.
    xr = jnp.transpose(x, (0, 2, 3, 1)).astype(cdt).reshape(n, ho, 2, wo, 2 * c)

    x_isz = jnp.dtype(cdt).itemsize
    out_isz = jnp.dtype(out_dtype).itemsize
    th, tco = _pick_conv_tiles(n, c, cout, ho, wo, x_isz, out_isz)
    tm = th * wo
    n_ht = pl.cdiv(ho, th)
    n_ct = pl.cdiv(cout, tco)

    # Grid order: keep the activation block resident across the Cout axis unless
    # the redundant weight traffic would exceed the redundant activation traffic.
    x_bytes = n * ho * 2 * wo * 2 * c * x_isz
    w_bytes = 2 * 2 * c * cout * x_isz
    cout_outer = (n_ct > 1) and (n * n_ht * w_bytes > n_ct * x_bytes)

    if cout_outer:
        grid = (n_ct, n, n_ht)
        x_map = lambda j, b, i: (b, i, 0, 0, 0)
        w_map = lambda j, b, i: (0, 0, j)
        b_map = lambda j, b, i: (0, j)
        o_map = lambda j, b, i: (b, j, i)
        dimsem = ("arbitrary", "parallel", "parallel")
    else:
        grid = (n, n_ht, n_ct)
        x_map = lambda b, i, j: (b, i, 0, 0, 0)
        w_map = lambda b, i, j: (0, 0, j)
        b_map = lambda b, i, j: (0, j)
        o_map = lambda b, i, j: (b, j, i)
        dimsem = ("parallel", "parallel", "arbitrary")

    params = pltpu.CompilerParams(
        dimension_semantics=dimsem,
        vmem_limit_bytes=int(min(_vmem_capacity_bytes() - (2 << 20),
                                 _vmem_budget_bytes() + (8 << 20))))

    out_flat = pl.pallas_call(
        _conv2x2_kernel,
        out_shape=jax.ShapeDtypeStruct((n, cout, ho * wo), out_dtype),
        grid_spec=pltpu.PrefetchScalarGridSpec(
            num_scalar_prefetch=0,
            grid=grid,
            in_specs=[
                pl.BlockSpec((1, th, 2, wo, 2 * c), x_map),
                # TODO(synk): when n_ct == 1 the weight/bias blocks are
                # grid-invariant; single-buffering them would free more VMEM on v7x.
                pl.BlockSpec((2, 2 * c, tco), w_map),
                pl.BlockSpec((1, tco), b_map),
            ],
            out_specs=pl.BlockSpec((1, tco, tm), o_map),
        ),
        compiler_params=params,
    )(xr, w_stacked, bias2d)

    # Free reshape back to the module's NCHW contract -- no output transpose.
    return out_flat.reshape(n, cout, ho, wo)


@jax.jit
def avg_pool_2x2(x):
    """AvgPool2d(kernel_size=2, stride=2) on NCHW input, natively in NCHW."""
    n, c, h, w = x.shape
    ho, wo = h // 2, w // 2
    if h != 2 * ho or w != 2 * wo:
        x = x[:, :, : 2 * ho, : 2 * wo]
    lane = 4 * wo
    # Free reshape: fold each vertical row pair into the lane dim.
    xr = x.reshape(n, c, ho, lane)

    # Constant pooling matrix (2x2 mean as one matmul); tiny and constant-folded
    # by XLA under jit.
    l_idx = jnp.arange(lane) % (2 * wo)
    pool = (0.25 * ((l_idx[:, None] // 2) ==
                    jnp.arange(wo)[None, :])).astype(x.dtype)

    isz = jnp.dtype(x.dtype).itemsize
    th, tc = _pick_pool_tiles(c, ho, lane, isz)
    n_ct = pl.cdiv(c, tc)
    n_ht = pl.cdiv(ho, th)

    params = pltpu.CompilerParams(
        dimension_semantics=("parallel", "parallel", "arbitrary"),
        vmem_limit_bytes=int(min(_vmem_capacity_bytes() - (2 << 20),
                                 _vmem_budget_bytes())))

    return pl.pallas_call(
        _avgpool2x2_kernel,
        out_shape=jax.ShapeDtypeStruct((n, c, ho, wo), x.dtype),
        grid_spec=pltpu.PrefetchScalarGridSpec(
            num_scalar_prefetch=0,
            grid=(n, n_ct, n_ht),
            in_specs=[
                pl.BlockSpec((1, tc, th, lane), lambda b, ci, hi: (b, ci, hi, 0)),
                pl.BlockSpec((lane, wo), lambda b, ci, hi: (0, 0)),
            ],
            out_specs=pl.BlockSpec((1, tc, th, wo), lambda b, ci, hi: (b, ci, hi, 0)),
        ),
        compiler_params=params,
    )(xr, pool)


# ---------------------------------------------------------------------------
# Downsample module (dims=2)
# ---------------------------------------------------------------------------
class Downsample:
    """2-D downsample: conv(k=2, s=2) if use_conv else avg-pool(k=2, s=2)."""

    def __init__(self, channels, use_conv, dims=2, out_channels=None, key=None,
                 compute_dtype=jnp.bfloat16):
        assert dims == 2, "This Pallas port implements the dims=2 path."
        # TODO(synk): dims=1 and dims=3 variants of the original module not ported.
        self.channels = channels
        self.out_channels = out_channels or channels
        self.use_conv = use_conv
        self.dims = dims
        self.compute_dtype = jnp.dtype(compute_dtype)

        if use_conv:
            if key is None:
                key = jax.random.PRNGKey(0)
            kw, kb = jax.random.split(key)
            fan_in = channels * 2 * 2
            bound = 1.0 / (fan_in ** 0.5)
            # PyTorch conv parameter shapes: weight (Cout, Cin, 2, 2), bias (Cout,)
            self.weight = jax.random.uniform(
                kw, (self.out_channels, channels, 2, 2),
                minval=-bound, maxval=bound, dtype=jnp.float32)
            self.bias = jax.random.uniform(
                kb, (self.out_channels,),
                minval=-bound, maxval=bound, dtype=jnp.float32)
            # Pre-fold the 2x2 kernel ONCE and pre-cast to the compute dtype
            # (no per-call reshape / astype pass over the weights):
            #   w_stacked[i, j*C + c, o] = weight[o, c, i, j]
            self.w_stacked = jnp.stack(
                [self.weight[:, :, i, :].transpose(2, 1, 0).reshape(
                    2 * channels, self.out_channels) for i in (0, 1)],
                axis=0).astype(self.compute_dtype)
            self.bias2d = self.bias.reshape(1, self.out_channels)  # stays f32
        else:
            assert self.channels == self.out_channels
            # Average pool uses a dedicated NCHW-native kernel; no parameters.

    def __call__(self, x):
        if self.use_conv:
            return conv_downsample_2x2(x, self.w_stacked, self.bias2d)
        return avg_pool_2x2(x)


# ---------------------------------------------------------------------------
# Reference (plain JAX/XLA) for sanity checking
# ---------------------------------------------------------------------------
def _reference_conv2x2_stride2(x, weight, bias):
    out = jax.lax.conv_general_dilated(
        x, weight, window_strides=(2, 2), padding="VALID",
        dimension_numbers=("NCHW", "OIHW", "NCHW"))
    return out + bias[None, :, None, None]


if __name__ == "__main__":
    key = jax.random.PRNGKey(0)
    kx, kp = jax.random.split(key)

    # Small shapes consistent with the module: batch=2, channels=4, spatial=16
    x = jax.random.normal(kx, (2, 4, 16, 16), dtype=jnp.float32)

    # use_conv=True, f32 compute: exact check against the lax conv reference.
    down_f32 = Downsample(channels=4, use_conv=True, dims=2, out_channels=8,
                          key=kp, compute_dtype=jnp.float32)
    y_f32 = jax.block_until_ready(down_f32(x))
    y_ref = _reference_conv2x2_stride2(x, down_f32.weight, down_f32.bias)
    assert y_f32.shape == (2, 8, 8, 8)
    assert jnp.allclose(y_f32, y_ref, atol=1e-5, rtol=1e-5)

    # Default bf16 compute path (f32 accumulation) -- looser tolerance.
    down_bf16 = Downsample(channels=4, use_conv=True, dims=2, out_channels=8, key=kp)
    y_bf16 = jax.block_until_ready(down_bf16(x))
    assert y_bf16.shape == (2, 8, 8, 8)
    assert jnp.allclose(y_bf16, y_ref, atol=5e-2, rtol=5e-2)

    # use_conv=False branch (avg pool 2x2 stride 2) -> native-NCHW kernel.
    down_pool = Downsample(channels=4, use_conv=False, dims=2)
    y_pool = jax.block_until_ready(down_pool(x))
    y_pool_ref = x.reshape(2, 4, 8, 2, 8, 2).mean(axis=(3, 5))
    assert y_pool.shape == (2, 4, 8, 8)
    assert jnp.allclose(y_pool, y_pool_ref, atol=1e-5, rtol=1e-5)

    print("KERNEL_OK")
</pallas_src>

<mosaic_0001>
module attributes {stable_mosaic.version = 11 : i64} {
  func.func @_conv2x2_kernel(%arg0: i32, %arg1: i32, %arg2: i32, %arg3: memref<1x8x2x8x8xf32, #tpu.memory_space<vmem>>, %arg4: memref<2x8x8xf32, #tpu.memory_space<vmem>>, %arg5: memref<1x8xf32, #tpu.memory_space<vmem>>, %arg6: memref<1x8x64xf32, #tpu.memory_space<vmem>>) attributes {dimension_semantics = [#tpu.dimension_semantics<parallel>, #tpu.dimension_semantics<parallel>, #tpu.dimension_semantics<arbitrary>], iteration_bounds = array<i64: 2, 1, 1>, scalar_prefetch = 0 : i64, scratch_operands = 0 : i64, tpu.core_type = #tpu.core_type<tc>, window_params = [{transform_indices = @transform_0, window_bounds = array<i64: 1, 8, 2, 8, 8>}, {transform_indices = @transform_1, window_bounds = array<i64: 2, 8, 8>}, {transform_indices = @transform_2, window_bounds = array<i64: 1, 8>}, {transform_indices = @transform_3, window_bounds = array<i64: 1, 8, 64>}]} {
    %c0 = arith.constant 0 : index
    %c0_0 = arith.constant 0 : index
    %c0_1 = arith.constant 0 : index
    %c0_2 = arith.constant 0 : index
    %c0_3 = arith.constant 0 : index
    %0 = vector.load %arg3[%c0, %c0_0, %c0_1, %c0_2, %c0_3] : memref<1x8x2x8x8xf32, #tpu.memory_space<vmem>>, vector<1x8x2x8x8xf32>
    %1 = vector.extract_strided_slice %0 {offsets = [0, 0, 0, 0, 0], sizes = [1, 8, 1, 8, 8], strides = [1, 1, 1, 1, 1]} : vector<1x8x2x8x8xf32> to vector<1x8x1x8x8xf32>
    %2 = vector.shape_cast %1 : vector<1x8x1x8x8xf32> to vector<8x8x8xf32>
    %3 = vector.shape_cast %2 : vector<8x8x8xf32> to vector<64x8xf32>
    %4 = vector.extract_strided_slice %0 {offsets = [0, 0, 1, 0, 0], sizes = [1, 8, 1, 8, 8], strides = [1, 1, 1, 1, 1]} : vector<1x8x2x8x8xf32> to vector<1x8x1x8x8xf32>
    %5 = vector.shape_cast %4 : vector<1x8x1x8x8xf32> to vector<8x8x8xf32>
    %6 = vector.shape_cast %5 : vector<8x8x8xf32> to vector<64x8xf32>
    %c0_4 = arith.constant 0 : index
    %c0_5 = arith.constant 0 : index
    %c0_6 = arith.constant 0 : index
    %7 = vector.load %arg4[%c0_4, %c0_5, %c0_6] : memref<2x8x8xf32, #tpu.memory_space<vmem>>, vector<1x8x8xf32>
    %8 = vector.shape_cast %7 : vector<1x8x8xf32> to vector<8x8xf32>
    %cst = arith.constant dense<0.000000e+00> : vector<64x8xf32>
    %9 = tpu.matmul %3, %8, %cst {dimension_numbers = #tpu.dot_dimension_numbers<[1], [0], [0], [1], [0, 0, 1, 1], [], []>} : vector<64x8xf32>, vector<8x8xf32>, vector<64x8xf32> -> vector<64x8xf32>
    %c1 = arith.constant 1 : index
    %c0_7 = arith.constant 0 : index
    %c0_8 = arith.constant 0 : index
    %10 = vector.load %arg4[%c1, %c0_7, %c0_8] : memref<2x8x8xf32, #tpu.memory_space<vmem>>, vector<1x8x8xf32>
    %11 = vector.shape_cast %10 : vector<1x8x8xf32> to vector<8x8xf32>
    %cst_9 = arith.constant dense<0.000000e+00> : vector<64x8xf32>
    %12 = tpu.matmul %6, %11, %cst_9 {dimension_numbers = #tpu.dot_dimension_numbers<[1], [0], [0], [1], [0, 0, 1, 1], [], []>} : vector<64x8xf32>, vector<8x8xf32>, vector<64x8xf32> -> vector<64x8xf32>
    %13 = arith.addf %9, %12 : vector<64x8xf32>
    %c0_10 = arith.constant 0 : index
    %c0_11 = arith.constant 0 : index
    %14 = vector.load %arg5[%c0_10, %c0_11] : memref<1x8xf32, #tpu.memory_space<vmem>>, vector<1x8xf32>
    %15 = vector.broadcast %14 : vector<1x8xf32> to vector<64x8xf32>
    %16 = arith.addf %13, %15 : vector<64x8xf32>
    %17 = tpu.transpose %16, [1, 0] : vector<64x8xf32> -> vector<8x64xf32>
    %18 = vector.shape_cast %17 : vector<8x64xf32> to vector<1x8x64xf32>
    %c0_12 = arith.constant 0 : index
    %c0_13 = arith.constant 0 : index
    %c0_14 = arith.constant 0 : index
    %19 = vector.load %arg6[%c0_12, %c0_13, %c0_14] : memref<1x8x64xf32, #tpu.memory_space<vmem>>, vector<1x8x64xf32>
    tpu.vector_store %arg6[%c0_12, %c0_13, %c0_14], %18 {strides = array<i32>} : memref<1x8x64xf32, #tpu.memory_space<vmem>>, vector<1x8x64xf32>,
    return
  }
  func.func @transform_0(%arg0: i32, %arg1: i32, %arg2: i32) -> (i32, i32, i32, i32, i32) {
    %c0_i32 = arith.constant 0 : i32
    %c0_i32_0 = arith.constant 0 : i32
    %c0_i32_1 = arith.constant 0 : i32
    %c0_i32_2 = arith.constant 0 : i32
    return %arg0, %arg1, %c0_i32, %c0_i32_0, %c0_i32_1 : i32, i32, i32, i32, i32
  }
  func.func @transform_1(%arg0: i32, %arg1: i32, %arg2: i32) -> (i32, i32, i32) {
    %c0_i32 = arith.constant 0 : i32
    %c0_i32_0 = arith.constant 0 : i32
    %c0_i32_1 = arith.constant 0 : i32
    return %c0_i32, %c0_i32_0, %arg2 : i32, i32, i32
  }
  func.func @transform_2(%arg0: i32, %arg1: i32, %arg2: i32) -> (i32, i32) {
    %c0_i32 = arith.constant 0 : i32
    %c0_i32_0 = arith.constant 0 : i32
    return %c0_i32, %arg2 : i32, i32
  }
  func.func @transform_3(%arg0: i32, %arg1: i32, %arg2: i32) -> (i32, i32, i32) {
    %c0_i32 = arith.constant 0 : i32
    return %arg0, %arg2, %arg1 : i32, i32, i32
  }
}

</mosaic_0001>

<llo_original>
// kernel: conv_downsample_2x2.1
$region0: #{conv_downsample_2x2.1}
  #allocation0 [shape = 'u32[]', space=smem, size = 0x4, offset = 0x4, fixed_abs, tag = 'smem constant byte address 0x4 - core index']
  #allocation1 [shape = 'u32[144,128]{1,0:T(1,128)}', space=vmem, size = 0x12000, scoped, tag = 'internal scratch']
  %s0 = inlined_call_operand.vmem [shape: f32[2,8,2,8,8], index: 0, kind: input, shape index: {}]
  %s1 = inlined_call_operand.vmem [shape: f32[2,8,8], index: 1, kind: input, shape index: {}]
  %s2 = inlined_call_operand.vmem [shape: f32[1,8], index: 2, kind: input, shape index: {}]
  %s3 = inlined_call_operand.vmem [shape: f32[2,8,64], index: 3, kind: output, shape index: {}]
  %s4 = sld [smem:[#allocation0]]
  $region45: #{conv_downsample_2x2.1} parent=0
    _
  %s6 = ssub.s32 1, %s4
  %s7 = scalar_select 0, %s6, %s4
  loop: start=0, step=1, limit=4
  $region2: #{conv_downsample_2x2.1} parent=0 // loop_pre_header
    _
  $region3: #{conv_downsample_2x2.1} parent=0 // loop_header
    %s9 = sphi 0, %s13
    %p10 = scmp.ge.s32.totalorder %s9, 4
    %s16 = sphi 0, %s35
    %s17 = sphi 0, %s31
    %s18 = sphi 0, %s27
    %s19 = sphi 0, %s16
    %s20 = sphi 0, %s17
    %s21 = sphi 0, %s18
    %s22 = sphi 0, %s19
    %s23 = sphi 0, %s20
    %s24 = sphi 0, %s21
    %s40 = sphi 0, %s42
    %s43 = sphi 0, %s40
    %s44 = sphi 0, %s43
    %s60 = sphi 0, %s44
    %s66 = sphi 0, %s68
    %s69 = sphi 0, %s66
    %s70 = sphi 0, %s69
    %s86 = sphi 0, %s70
    %s92 = sphi 0, %s94
    %s95 = sphi 0, %s92
    %s96 = sphi 0, %s95
    %s112 = sphi 0, %s96
    %s122 = sphi 0, %s124
    %s125 = sphi 0, %s122
    %s126 = sphi 0, %s125
    %s142 = sphi 0, %s126
  $region4: #{conv_downsample_2x2.1} parent=0 // loop_header_branch
    %12 = sbr.rel (%p10) target = $region8
  $region5: #{conv_downsample_2x2.1} parent=0 // loop_body
    %s14 = ssub.s32 %s9, 1
    %s15 = ssub.s32 %s9, 2
    %s25 = sadd.s32 1, %s18
    %p26 = scmp.ge.s32.totalorder %s25, 1
    %s27 = scalar_select %p26, 0, %s25
    %s28 = sadd.s32 1, %s17
    %s29 = scalar_select %p26, %s28, %s17
    %p30 = scmp.ge.s32.totalorder %s29, 1
    %s31 = scalar_select %p30, 0, %s29
    %s32 = sadd.s32 1, %s16
    %s33 = scalar_select %p30, %s32, %s16
    %p34 = scmp.ge.s32.totalorder %s33, 2
    %s35 = scalar_select %p34, 0, %s33
    %s36 = ssub.s32 %s16, %s35
    %s37 = ssub.s32 %s17, %s31
    %s38 = sor.u32 %s36, %s37
    %p39 = scmp.eq.s32.totalorder %s38, 0
    %s41 = sadd.s32 %s40, 1
    %s42 = scalar_select %p39, %s40, %s41
    %p45 = pneg %p39
    %p46 = scmp.eq.s32.totalorder %s9, 1
    %p47 = por %p45, %p46
    %p48 = scmp.ne.s32.totalorder %s40, %s43
    %p49 = scmp.eq.s32.totalorder %s9, 0
    %p50 = por %p48, %p49
    %p51 = scmp.ne.s32.totalorder %s40, %s43
    %p52 = scmp.eq.s32.totalorder %s14, 1
    %p53 = por %p51, %p52
    %p54 = scmp.ne.s32.totalorder %s43, %s44
    %p55 = scmp.eq.s32.totalorder %s14, 0
    %p56 = por %p54, %p55
    %p57 = scmp.ne.s32.totalorder %s43, %s44
    %p58 = scmp.eq.s32.totalorder %s15, 1
    %p59 = por %p57, %p58
    %p61 = scmp.ne.s32.totalorder %s44, %s60
    %p62 = scmp.eq.s32.totalorder %s15, 0
    %p63 = por %p61, %p62
    %s64 = ssub.s32 %s18, %s27
    %p65 = scmp.eq.s32.totalorder %s64, 0
    %s67 = sadd.s32 %s66, 1
    %s68 = scalar_select %p65, %s66, %s67
    %p71 = pneg %p65
    %p72 = scmp.eq.s32.totalorder %s9, 1
    %p73 = por %p71, %p72
    %p74 = scmp.ne.s32.totalorder %s66, %s69
    %p75 = scmp.eq.s32.totalorder %s9, 0
    %p76 = por %p74, %p75
    %p77 = scmp.ne.s32.totalorder %s66, %s69
    %p78 = scmp.eq.s32.totalorder %s14, 1
    %p79 = por %p77, %p78
    %p80 = scmp.ne.s32.totalorder %s69, %s70
    %p81 = scmp.eq.s32.totalorder %s14, 0
    %p82 = por %p80, %p81
    %p83 = scmp.ne.s32.totalorder %s69, %s70
    %p84 = scmp.eq.s32.totalorder %s15, 1
    %p85 = por %p83, %p84
    %p87 = scmp.ne.s32.totalorder %s70, %s86
    %p88 = scmp.eq.s32.totalorder %s15, 0
    %p89 = por %p87, %p88
    %s90 = ssub.s32 %s18, %s27
    %p91 = scmp.eq.s32.totalorder %s90, 0
    %s93 = sadd.s32 %s92, 1
    %s94 = scalar_select %p91, %s92, %s93
    %p97 = pneg %p91
    %p98 = scmp.eq.s32.totalorder %s9, 1
    %p99 = por %p97, %p98
    %p100 = scmp.ne.s32.totalorder %s92, %s95
    %p101 = scmp.eq.s32.totalorder %s9, 0
    %p102 = por %p100, %p101
    %p103 = scmp.ne.s32.totalorder %s92, %s95
    %p104 = scmp.eq.s32.totalorder %s14, 1
    %p105 = por %p103, %p104
    %p106 = scmp.ne.s32.totalorder %s95, %s96
    %p107 = scmp.eq.s32.totalorder %s14, 0
    %p108 = por %p106, %p107
    %p109 = scmp.ne.s32.totalorder %s95, %s96
    %p110 = scmp.eq.s32.totalorder %s15, 1
    %p111 = por %p109, %p110
    %p113 = scmp.ne.s32.totalorder %s96, %s112
    %p114 = scmp.eq.s32.totalorder %s15, 0
    %p115 = por %p113, %p114
    %s116 = ssub.s32 %s16, %s35
    %s117 = ssub.s32 %s18, %s27
    %s118 = sor.u32 %s116, %s117
    %s119 = ssub.s32 %s17, %s31
    %s120 = sor.u32 %s118, %s119
    %p121 = scmp.eq.s32.totalorder %s120, 0
    %s123 = sadd.s32 %s122, 1
    %s124 = scalar_select %p121, %s122, %s123
    %p127 = pneg %p121
    %p128 = scmp.eq.s32.totalorder %s9, 1
    %p129 = por %p127, %p128
    %p130 = scmp.ne.s32.totalorder %s122, %s125
    %p131 = scmp.eq.s32.totalorder %s9, 0
    %p132 = por %p130, %p131
    %p133 = scmp.ne.s32.totalorder %s122, %s125
    %p134 = scmp.eq.s32.totalorder %s14, 1
    %p135 = por %p133, %p134
    %p136 = scmp.ne.s32.totalorder %s125, %s126
    %p137 = scmp.eq.s32.totalorder %s14, 0
    %p138 = por %p136, %p137
    %p139 = scmp.ne.s32.totalorder %s125, %s126
    %p140 = scmp.eq.s32.totalorder %s15, 1
    %p141 = por %p139, %p140
    %p143 = scmp.ne.s32.totalorder %s126, %s142
    %p144 = scmp.eq.s32.totalorder %s15, 0
    %p145 = por %p143, %p144
    %p146 = scmp.le.s32.totalorder 1, %s9
    %p147 = scmp.lt.s32.totalorder %s9, 3
    %p148 = pnand %p146, %p147
    %p149 = pneg %p148
    // Predicated region
    $region9: #{conv_downsample_2x2.1} parent=5 // pred_check
      _
    $region10: #{conv_downsample_2x2.1} parent=5 // pred_check_branch
      %151 = sbr.rel (%p148) target = $region12
    $region11: #{conv_downsample_2x2.1} parent=5 // pred_region
      %s152 = ssub.s32 %s9, 1
      // Predicated region
      $region13: #{conv_downsample_2x2.1} parent=11 // pred_check
        %p153 = pneg %p82
      $region14: #{conv_downsample_2x2.1} parent=11 // pred_check_branch
        %155 = sbr.rel (%p153) target = $region16
      $region15: #{conv_downsample_2x2.1} parent=11 // pred_region
        %p156 = scmp.lt.s32.totalorder %s21, 0
        %s157 = scalar_select %p156, %s21, 0
        %s158 = smul.addr %s157, 8
        %s159 = scalar_lea.vmem %s1, %s158
      $region16: #{conv_downsample_2x2.1} parent=11 // pred_fallthru
        _
      // Predicated region
      $region17: #{conv_downsample_2x2.1} parent=11 // pred_check
        %p160 = pneg %p108
      $region18: #{conv_downsample_2x2.1} parent=11 // pred_check_branch
        %162 = sbr.rel (%p160) target = $region20
      $region19: #{conv_downsample_2x2.1} parent=11 // pred_region
        %p163 = scmp.lt.s32.totalorder %s21, 0
        %s164 = scalar_select %p163, %s21, 0
        %s165 = scalar_lea.vmem %s2, %s164
      $region20: #{conv_downsample_2x2.1} parent=11 // pred_fallthru
        _
    $region12: #{conv_downsample_2x2.1} parent=5 // pred_fallthru
      _
    %p166 = scmp.lt.s32.totalorder %s9, 2
    // Predicated region
    $region21: #{conv_downsample_2x2.1} parent=5 // pred_check
      %p167 = pneg %p166
    $region22: #{conv_downsample_2x2.1} parent=5 // pred_check_branch
      %169 = sbr.rel (%p167) target = $region24
    $region23: #{conv_downsample_2x2.1} parent=5 // pred_region
      // Predicated region
      $region25: #{conv_downsample_2x2.1} parent=23 // pred_check
        %p170 = pneg %p50
      $region26: #{conv_downsample_2x2.1} parent=23 // pred_check_branch
        %172 = sbr.rel (%p170) target = $region28
      $region27: #{conv_downsample_2x2.1} parent=23 // pred_region
        %s173 = smul.u32 8, %s17
        %p174 = scmp.lt.s32.totalorder %s16, 1
        %s175 = scalar_select %p174, %s16, 1
        %p176 = scmp.lt.s32.totalorder %s173, 7
        %s177 = scalar_select %p176, %s173, 7
        %s178 = smul.addr %s177, 2
        %s179 = smul.addr %s175, 16
        %s180 = sadd.s32 %s178, %s179
        %s181 = smul.addr %s180, 8
        %s182 = scalar_lea.vmem %s0, %s181
        %s183 = smul.u32 8, %s17
      $region28: #{conv_downsample_2x2.1} parent=23 // pred_fallthru
        _
    $region24: #{conv_downsample_2x2.1} parent=5 // pred_fallthru
      _
    %p184 = scmp.le.s32.totalorder 1, %s9
    %p185 = scmp.lt.s32.totalorder %s9, 3
    %p186 = pnand %p184, %p185
    %p187 = pneg %p186
    // Predicated region
    $region29: #{conv_downsample_2x2.1} parent=5 // pred_check
      _
    $region30: #{conv_downsample_2x2.1} parent=5 // pred_check_branch
      %189 = sbr.rel (%p186) target = $region32
    $region31: #{conv_downsample_2x2.1} parent=5 // pred_region
      %s190 = ssub.s32 %s9, 1
      %s191 = smul.u32 8, %s20
      %p192 = scmp.lt.s32.totalorder %s19, 1
      %s193 = scalar_select %p192, %s19, 1
      %p194 = scmp.lt.s32.totalorder %s191, 7
      %s195 = scalar_select %p194, %s191, 7
      %s196 = smul.addr %s195, 2
      %s197 = smul.addr %s193, 16
      %s198 = sadd.s32 %s196, %s197
      %s199 = smul.addr %s198, 8
      %s200 = scalar_lea.vmem %s0, %s199
      %p201 = pneg %p56
      %p202 = pneg %p53
      %p203 = scmp.lt.s32.totalorder %s21, 0
      %s204 = scalar_select %p203, %s21, 0
      %s205 = smul.addr %s204, 8
      %s206 = scalar_lea.vmem %s1, %s205
      %p207 = pneg %p82
      %p208 = pneg %p79
      %p209 = scmp.lt.s32.totalorder %s21, 0
      %s210 = scalar_select %p209, %s21, 0
      %s211 = scalar_lea.vmem %s2, %s210
      %p212 = pneg %p108
      %p213 = pneg %p105
      %p214 = pneg %p138
      %p215 = pneg %p135
      %p216 = scmp.lt.s32.totalorder %s19, 1
      %s217 = scalar_select %p216, %s19, 1
      %p218 = scmp.lt.s32.totalorder %s21, 0
      %s219 = scalar_select %p218, %s21, 0
      %p220 = scmp.lt.s32.totalorder %s20, 0
      %s221 = scalar_select %p220, %s20, 0
      %s222 = sadd.s32 %s221, %s219
      %s223 = sadd.s32 %s222, %s217
      %s224 = smul.addr %s223, 8
      %s225 = scalar_lea.vmem %s3, %s224
      %s226 = smul.u32 8, %s20
      %p227 = scmp.lt.s32.totalorder %s19, 1
      %s228 = scalar_select %p227, %s19, 1
      %p229 = scmp.lt.s32.totalorder %s226, 7
      %s230 = scalar_select %p229, %s226, 7
      %s231 = smul.addr %s230, 2
      %s232 = smul.addr %s228, 16
      %s233 = sadd.s32 %s231, %s232
      %s234 = smul.addr %s233, 8
      %s235 = scalar_lea.vmem %s0, %s234
      %s236 = smul.u32 8, %s20
      %p237 = scmp.lt.s32.totalorder %s21, 0
      %s238 = scalar_select %p237, %s21, 0
      %s239 = smul.addr %s238, 8
      %s240 = scalar_lea.vmem %s1, %s239
      %p241 = scmp.lt.s32.totalorder %s21, 0
      %s242 = scalar_select %p241, %s21, 0
      %s243 = scalar_lea.vmem %s2, %s242
      %p244 = scmp.lt.s32.totalorder %s19, 1
      %s245 = scalar_select %p244, %s19, 1
      %p246 = scmp.lt.s32.totalorder %s21, 0
      %s247 = scalar_select %p246, %s21, 0
      %p248 = scmp.lt.s32.totalorder %s20, 0
      %s249 = scalar_select %p248, %s20, 0
      %s250 = sadd.s32 %s249, %s247
      %s251 = sadd.s32 %s250, %s245
      %s252 = smul.addr %s251, 8
      %s253 = scalar_lea.vmem %s3, %s252
      %v254 = vld [vmem:[%s235] sm:$0xff]
      %v255 = vld [vmem:[%s235 + $0x8] sm:$0xff]
      %v256 = vld [vmem:[%s235 + $0x10] sm:$0xff]
      %v257 = vld [vmem:[%s235 + $0x18] sm:$0xff]
      %v258 = vld [vmem:[%s235 + $0x20] sm:$0xff]
      %v259 = vld [vmem:[%s235 + $0x28] sm:$0xff]
      %v260 = vld [vmem:[%s235 + $0x30] sm:$0xff]
      %v261 = vld [vmem:[%s235 + $0x38] sm:$0xff]
      %v262 = vld [vmem:[%s235 + $0x40] sm:$0xff]
      %v263 = vld [vmem:[%s235 + $0x48] sm:$0xff]
      %v264 = vld [vmem:[%s235 + $0x50] sm:$0xff]
      %v265 = vld [vmem:[%s235 + $0x58] sm:$0xff]
      %v266 = vld [vmem:[%s235 + $0x60] sm:$0xff]
      %v267 = vld [vmem:[%s235 + $0x68] sm:$0xff]
      %v268 = vld [vmem:[%s235 + $0x70] sm:$0xff]
      %v269 = vld [vmem:[%s235 + $0x78] sm:$0xff]
      %v270 = vld [vmem:[%s240] sm:$0xff]
      %s271 = scalar_lea.vmem %s240, 8
      %v272 = vld [vmem:[%s271] sm:$0xff]
      %vm273 = vcmask 64512
      %v275 = vsel %vm273, %v255, 0
      %v278 = vsel %vm273, %v257, 0
      %v281 = vsel %vm273, %v259, 0
      %v284 = vsel %vm273, %v261, 0
      %v287 = vsel %vm273, %v263, 0
      %v290 = vsel %vm273, %v265, 0
      %v293 = vsel %vm273, %v267, 0
      %v296 = vsel %vm273, %v269, 0
      %298 = vmatprep.subr.mxu0 0.0
      %299 = vmatpush1.msra.mxu0 0.0
      %300 = vmatprep.subr.mxu0 0.0
      %301 = vmatpush1.msra.mxu0 0.0
      %302 = vmatprep.subr.mxu0 0.0
      %303 = vmatpush1.msra.mxu0 0.0
      %304 = vmatprep.subr.mxu0 0.0
      %305 = vmatpush1.msra.mxu0 0.0
      %306 = vmatprep.subr.mxu0 0.0
      %307 = vmatpush1.msra.mxu0 0.0
      %308 = vmatprep.subr.mxu0 0.0
      %309 = vmatpush1.msra.mxu0 0.0
      %310 = vmatprep.subr.mxu0 0.0
      %311 = vmatpush1.msra.mxu0 0.0
      %312 = vmatprep.subr.mxu0 0.0
      %313 = vmatpush1.msra.mxu0 0.0
      %314 = vmatprep.subr.mxu0 0.0
      %315 = vmatpush1.msra.mxu0 0.0
      %316 = vmatprep.subr.mxu0 0.0
      %317 = vmatpush1.msra.mxu0 0.0
      %318 = vmatprep.subr.mxu0 0.0
      %319 = vmatpush1.msra.mxu0 0.0
      %320 = vmatprep.subr.mxu0 0.0
      %321 = vmatpush1.msra.mxu0 0.0
      %322 = vmatprep.subr.mxu0 0.0
      %323 = vmatpush1.msra.mxu0 0.0
      %324 = vmatprep.subr.mxu0 0.0
      %325 = vmatpush1.msra.mxu0 0.0
      %326 = vmatprep.subr.mxu0 0.0
      %327 = vmatpush1.msra.mxu0 0.0
      %328 = vmatprep.subr.mxu0 0.0
      %329 = vmatpush1.msra.mxu0 %v272
      %330 = vmatprep.subr.mxu0 0.0
      %331 = vmatpush2.msra.mxu0 0.0
      %332 = vmatprep.subr.mxu0 0.0
      %333 = vmatpush2.msra.mxu0 0.0
      %334 = vmatprep.subr.mxu0 0.0
      %335 = vmatpush2.msra.mxu0 0.0
      %336 = vmatprep.subr.mxu0 0.0
      %337 = vmatpush2.msra.mxu0 0.0
      %338 = vmatprep.subr.mxu0 0.0
      %339 = vmatpush2.msra.mxu0 0.0
      %340 = vmatprep.subr.mxu0 0.0
      %341 = vmatpush2.msra.mxu0 0.0
      %342 = vmatprep.subr.mxu0 0.0
      %343 = vmatpush2.msra.mxu0 0.0
      %344 = vmatprep.subr.mxu0 0.0
      %345 = vmatpush2.msra.mxu0 0.0
      %346 = vmatprep.subr.mxu0 0.0
      %347 = vmatpush2.msra.mxu0 0.0
      %348 = vmatprep.subr.mxu0 0.0
      %349 = vmatpush2.msra.mxu0 0.0
      %350 = vmatprep.subr.mxu0 0.0
      %351 = vmatpush2.msra.mxu0 0.0
      %352 = vmatprep.subr.mxu0 0.0
      %353 = vmatpush2.msra.mxu0 0.0
      %354 = vmatprep.subr.mxu0 0.0
      %355 = vmatpush2.msra.mxu0 0.0
      %356 = vmatprep.subr.mxu0 0.0
      %357 = vmatpush2.msra.mxu0 0.0
      %358 = vmatprep.subr.mxu0 0.0
      %359 = vmatpush2.msra.mxu0 0.0
      %360 = vmatprep.subr.mxu0 0.0
      %361 = vmatpush2.msra.mxu0 0.0
      %362 = vmatprep.mubr.f32.mxu0 0.0
      %363 = vmatmul.mubr.f32.gmra.mxu0 %v275
      %v364 = vpop.f32.mrf.mxu0
      %v365 = vadd.f32 0.0, %v364
      %v366 = vpop.f32.mrf.mxu0
      %367 = vmatprep.mubr.f32.mxu0 0.0
      %368 = vmatmul.mubr.f32.gmra.mxu0 %v278
      %v369 = vpop.f32.mrf.mxu0
      %v370 = vadd.f32 0.0, %v369
      %v371 = vpop.f32.mrf.mxu0
      %372 = vmatprep.mubr.f32.mxu0 0.0
      %373 = vmatmul.mubr.f32.gmra.mxu0 %v281
      %v374 = vpop.f32.mrf.mxu0
      %v375 = vadd.f32 0.0, %v374
      %v376 = vpop.f32.mrf.mxu0
      %377 = vmatprep.mubr.f32.mxu0 0.0
      %378 = vmatmul.mubr.f32.gmra.mxu0 %v284
      %v379 = vpop.f32.mrf.mxu0
      %v380 = vadd.f32 0.0, %v379
      %v381 = vpop.f32.mrf.mxu0
      %382 = vmatprep.mubr.f32.mxu0 0.0
      %383 = vmatmul.mubr.f32.gmra.mxu0 %v287
      %v384 = vpop.f32.mrf.mxu0
      %v385 = vadd.f32 0.0, %v384
      %v386 = vpop.f32.mrf.mxu0
      %387 = vmatprep.mubr.f32.mxu0 0.0
      %388 = vmatmul.mubr.f32.gmra.mxu0 %v290
      %v389 = vpop.f32.mrf.mxu0
      %v390 = vadd.f32 0.0, %v389
      %v391 = vpop.f32.mrf.mxu0
      %392 = vmatprep.mubr.f32.mxu0 0.0
      %393 = vmatmul.mubr.f32.gmra.mxu0 %v293
      %v394 = vpop.f32.mrf.mxu0
      %v395 = vadd.f32 0.0, %v394
      %v396 = vpop.f32.mrf.mxu0
      %397 = vmatprep.mubr.f32.mxu0 0.0
      %398 = vmatmul.mubr.f32.gmra.mxu0 %v296
      %v399 = vpop.f32.mrf.mxu0
      %v400 = vadd.f32 0.0, %v399
      %v401 = vpop.f32.mrf.mxu0
      %402 = vdwg.mxu0
      %v404 = vsel %vm273, %v254, 0
      %v407 = vsel %vm273, %v256, 0
      %v410 = vsel %vm273, %v258, 0
      %v413 = vsel %vm273, %v260, 0
      %v416 = vsel %vm273, %v262, 0
      %v419 = vsel %vm273, %v264, 0
      %v422 = vsel %vm273, %v266, 0
      %v425 = vsel %vm273, %v268, 0
      %427 = vmatprep.subr.mxu0 0.0
      %428 = vmatpush1.msra.mxu0 0.0
      %429 = vmatprep.subr.mxu0 0.0
      %430 = vmatpush1.msra.mxu0 0.0
      %431 = vmatprep.subr.mxu0 0.0
      %432 = vmatpush1.msra.mxu0 0.0
      %433 = vmatprep.subr.mxu0 0.0
      %434 = vmatpush1.msra.mxu0 0.0
      %435 = vmatprep.subr.mxu0 0.0
      %436 = vmatpush1.msra.mxu0 0.0
      %437 = vmatprep.subr.mxu0 0.0
      %438 = vmatpush1.msra.mxu0 0.0
      %439 = vmatprep.subr.mxu0 0.0
      %440 = vmatpush1.msra.mxu0 0.0
      %441 = vmatprep.subr.mxu0 0.0
      %442 = vmatpush1.msra.mxu0 0.0
      %443 = vmatprep.subr.mxu0 0.0
      %444 = vmatpush1.msra.mxu0 0.0
      %445 = vmatprep.subr.mxu0 0.0
      %446 = vmatpush1.msra.mxu0 0.0
      %447 = vmatprep.subr.mxu0 0.0
      %448 = vmatpush1.msra.mxu0 0.0
      %449 = vmatprep.subr.mxu0 0.0
      %450 = vmatpush1.msra.mxu0 0.0
      %451 = vmatprep.subr.mxu0 0.0
      %452 = vmatpush1.msra.mxu0 0.0
      %453 = vmatprep.subr.mxu0 0.0
      %454 = vmatpush1.msra.mxu0 0.0
      %455 = vmatprep.subr.mxu0 0.0
      %456 = vmatpush1.msra.mxu0 0.0
      %457 = vmatprep.subr.mxu0 0.0
      %458 = vmatpush1.msra.mxu0 %v270
      %459 = vmatprep.subr.mxu0 0.0
      %460 = vmatpush2.msra.mxu0 0.0
      %461 = vmatprep.subr.mxu0 0.0
      %462 = vmatpush2.msra.mxu0 0.0
      %463 = vmatprep.subr.mxu0 0.0
      %464 = vmatpush2.msra.mxu0 0.0
      %465 = vmatprep.subr.mxu0 0.0
      %466 = vmatpush2.msra.mxu0 0.0
      %467 = vmatprep.subr.mxu0 0.0
      %468 = vmatpush2.msra.mxu0 0.0
      %469 = vmatprep.subr.mxu0 0.0
      %470 = vmatpush2.msra.mxu0 0.0
      %471 = vmatprep.subr.mxu0 0.0
      %472 = vmatpush2.msra.mxu0 0.0
      %473 = vmatprep.subr.mxu0 0.0
      %474 = vmatpush2.msra.mxu0 0.0
      %475 = vmatprep.subr.mxu0 0.0
      %476 = vmatpush2.msra.mxu0 0.0
      %477 = vmatprep.subr.mxu0 0.0
      %478 = vmatpush2.msra.mxu0 0.0
      %479 = vmatprep.subr.mxu0 0.0
      %480 = vmatpush2.msra.mxu0 0.0
      %481 = vmatprep.subr.mxu0 0.0
      %482 = vmatpush2.msra.mxu0 0.0
      %483 = vmatprep.subr.mxu0 0.0
      %484 = vmatpush2.msra.mxu0 0.0
      %485 = vmatprep.subr.mxu0 0.0
      %486 = vmatpush2.msra.mxu0 0.0
      %487 = vmatprep.subr.mxu0 0.0
      %488 = vmatpush2.msra.mxu0 0.0
      %489 = vmatprep.subr.mxu0 0.0
      %490 = vmatpush2.msra.mxu0 0.0
      %491 = vmatprep.mubr.f32.mxu0 0.0
      %492 = vmatmul.mubr.f32.gmra.mxu0 %v404
      %v493 = vpop.f32.mrf.mxu0
      %v494 = vadd.f32 %v365, %v493
      %v495 = vpop.f32.mrf.mxu0
      %496 = vmatprep.mubr.f32.mxu0 0.0
      %497 = vmatmul.mubr.f32.gmra.mxu0 %v407
      %v498 = vpop.f32.mrf.mxu0
      %v499 = vadd.f32 %v370, %v498
      %v500 = vpop.f32.mrf.mxu0
      %501 = vmatprep.mubr.f32.mxu0 0.0
      %502 = vmatmul.mubr.f32.gmra.mxu0 %v410
      %v503 = vpop.f32.mrf.mxu0
      %v504 = vadd.f32 %v375, %v503
      %v505 = vpop.f32.mrf.mxu0
      %506 = vmatprep.mubr.f32.mxu0 0.0
      %507 = vmatmul.mubr.f32.gmra.mxu0 %v413
      %v508 = vpop.f32.mrf.mxu0
      %v509 = vadd.f32 %v380, %v508
      %v510 = vpop.f32.mrf.mxu0
      %511 = vmatprep.mubr.f32.mxu0 0.0
      %512 = vmatmul.mubr.f32.gmra.mxu0 %v416
      %v513 = vpop.f32.mrf.mxu0
      %v514 = vadd.f32 %v385, %v513
      %v515 = vpop.f32.mrf.mxu0
      %516 = vmatprep.mubr.f32.mxu0 0.0
      %517 = vmatmul.mubr.f32.gmra.mxu0 %v419
      %v518 = vpop.f32.mrf.mxu0
      %v519 = vadd.f32 %v390, %v518
      %v520 = vpop.f32.mrf.mxu0
      %521 = vmatprep.mubr.f32.mxu0 0.0
      %522 = vmatmul.mubr.f32.gmra.mxu0 %v422
      %v523 = vpop.f32.mrf.mxu0
      %v524 = vadd.f32 %v395, %v523
      %v525 = vpop.f32.mrf.mxu0
      %526 = vmatprep.mubr.f32.mxu0 0.0
      %527 = vmatmul.mubr.f32.gmra.mxu0 %v425
      %v528 = vpop.f32.mrf.mxu0
      %v529 = vadd.f32 %v400, %v528
      %v530 = vpop.f32.mrf.mxu0
      %531 = vdwg.mxu0
      %v532 = vld [vmem:[%s243] sm:$0x1]
      %v534 = vlaneseq
      %v535 = vshrl.u32 %v534, 7
      %v536 = vsub.s32 0, %v535
      %v537 = vrot.slane %v532, %v536
      %v539 = vadd.f32 %v494, %v537
      %v540 = vadd.f32 %v499, %v537
      %v541 = vadd.f32 %v504, %v537
      %v542 = vadd.f32 %v509, %v537
      %v543 = vadd.f32 %v514, %v537
      %v544 = vadd.f32 %v519, %v537
      %v545 = vadd.f32 %v524, %v537
      %v546 = vadd.f32 %v529, %v537
      %547 = vxpose.xlu0.b32.start [1/16] %v539, 128
      %548 = vxpose.xlu0.b32.cont [2/16] %v540, 128
      %549 = vxpose.xlu0.b32.cont [3/16] %v541, 128
      %550 = vxpose.xlu0.b32.cont [4/16] %v542, 128
      %551 = vxpose.xlu0.b32.cont [5/16] %v543, 128
      %552 = vxpose.xlu0.b32.cont [6/16] %v544, 128
      %553 = vxpose.xlu0.b32.cont [7/16] %v545, 128
      %554 = vxpose.xlu0.b32.cont [8/16] %v546, 128
      %555 = vxpose.xlu0.b32.cont [9/16] 0.0, 128
      %556 = vxpose.xlu0.b32.cont [10/16] 0.0, 128
      %557 = vxpose.xlu0.b32.cont [11/16] 0.0, 128
      %558 = vxpose.xlu0.b32.cont [12/16] 0.0, 128
      %559 = vxpose.xlu0.b32.cont [13/16] 0.0, 128
      %560 = vxpose.xlu0.b32.cont [14/16] 0.0, 128
      %561 = vxpose.xlu0.b32.cont [15/16] 0.0, 128
      %562 = vxpose.xlu0.b32.end [16/16] 0.0, 128
      %v563 = vpop.trf.xlu0
      %v564 = vpop.trf.xlu0
      %v565 = vpop.trf.xlu0
      %v566 = vpop.trf.xlu0
      %v567 = vpop.trf.xlu0
      %v568 = vpop.trf.xlu0
      %v569 = vpop.trf.xlu0
      %v570 = vpop.trf.xlu0
      %v571 = vpop.trf.xlu0
      %v572 = vpop.trf.xlu0
      %v573 = vpop.trf.xlu0
      %v574 = vpop.trf.xlu0
      %v575 = vpop.trf.xlu0
      %v576 = vpop.trf.xlu0
      %v577 = vpop.trf.xlu0
      %v578 = vpop.trf.xlu0
      %vm579 = vcmask 523264
      %580 = vst.msk [vmem:[%s253] sm:$0xff] %vm579, %v563
      %p581 = scmp.lt.s32.totalorder %s19, 1
      %s582 = scalar_select %p581, %s19, 1
      %p583 = scmp.lt.s32.totalorder %s21, 0
      %s584 = scalar_select %p583, %s21, 0
      %p585 = scmp.lt.s32.totalorder %s20, 0
      %s586 = scalar_select %p585, %s20, 0
      %s587 = sadd.s32 %s586, %s584
      %s588 = sadd.s32 %s587, %s582
      %s589 = smul.addr %s588, 8
      %s590 = scalar_lea.vmem %s3, %s589
      // Predicated region
      $region33: #{conv_downsample_2x2.1} parent=31 // pred_check
        %p591 = pneg %p135
      $region34: #{conv_downsample_2x2.1} parent=31 // pred_check_branch
        %593 = sbr.rel (%p591) target = $region36
      $region35: #{conv_downsample_2x2.1} parent=31 // pred_region
        _
      $region36: #{conv_downsample_2x2.1} parent=31 // pred_fallthru
        _
    $region32: #{conv_downsample_2x2.1} parent=5 // pred_fallthru
      _
    %p594 = scmp.le.s32.totalorder 2, %s9
    // Predicated region
    $region37: #{conv_downsample_2x2.1} parent=5 // pred_check
      %p595 = pneg %p594
    $region38: #{conv_downsample_2x2.1} parent=5 // pred_check_branch
      %597 = sbr.rel (%p595) target = $region40
    $region39: #{conv_downsample_2x2.1} parent=5 // pred_region
      %s598 = ssub.s32 %s9, 2
      // Predicated region
      $region41: #{conv_downsample_2x2.1} parent=39 // pred_check
        %p599 = pneg %p141
      $region42: #{conv_downsample_2x2.1} parent=39 // pred_check_branch
        %601 = sbr.rel (%p599) target = $region44
      $region43: #{conv_downsample_2x2.1} parent=39 // pred_region
        %p602 = scmp.lt.s32.totalorder %s22, 1
        %s603 = scalar_select %p602, %s22, 1
        %p604 = scmp.lt.s32.totalorder %s24, 0
        %s605 = scalar_select %p604, %s24, 0
        %p606 = scmp.lt.s32.totalorder %s23, 0
        %s607 = scalar_select %p606, %s23, 0
        %s608 = sadd.s32 %s607, %s605
        %s609 = sadd.s32 %s608, %s603
        %s610 = smul.addr %s609, 8
        %s611 = scalar_lea.vmem %s3, %s610
      $region44: #{conv_downsample_2x2.1} parent=39 // pred_fallthru
        _
    $region40: #{conv_downsample_2x2.1} parent=5 // pred_fallthru
      _
  $region6: #{conv_downsample_2x2.1} parent=0 // loop_footer
    %s13 = sadd.s32 1, %s9
  $region7: #{conv_downsample_2x2.1} parent=0 // loop_footer_branch
    %8 = sbr.rel target = $region3
  $region8: #{conv_downsample_2x2.1} parent=0 // loop_exit
    _

</llo_original>
